<compile_context>
chip_gen: v6e
topology: v6e:2x2x1
jax: 0.10.0
libtpu: 0.0.40
codegen_flags: <defaults>
</compile_context>

<pallas_src>
from functools import partial

import jax
import jax.numpy as jnp
from jax import lax
from jax.experimental import pallas as pl
from jax.experimental.pallas import tpu as pltpu


def _one_conv_kernel(mask_ref, x_ref, w_ref, out_ref, *,
                     H, W, Cin, Cin_pad, Cout, K, pad, B_blk):
    """One grid step == B_blk batch elements.

    mask_ref: (K*K*Cin_pad, H*W) f32   static halo masks, resident
    x_ref   : (B_blk, Cin_pad, H*W)    channel-padded input, lane dim = H*W
    w_ref   : (Cout, K*K*Cin_pad)      repacked / zero-padded conv weights
    out_ref : (B_blk, Cin+Cout, H*W)   concat(x, relu(conv(x))) per batch elem
    """
    HW = H * W

    # Build one lane-concatenated im2col for the whole batch block:
    #   (K*K*Cin_pad, B_blk*HW).
    # Cin_pad = 8 and HW = 256 keep every concat 8-sublane / 128-lane aligned,
    # so the concatenations are pure vreg placement (no relayout copies).
    cols = []
    for b in range(B_blk):
        xb = x_ref[b].astype(jnp.float32)                       # (Cin_pad, HW)
        patches = []
        for kh in range(K):
            for kw in range(K):
                s = (kh - pad) * W + (kw - pad)                 # flat tap shift
                rolled = xb if s == 0 else pltpu.roll(xb, shift=(-s) % HW, axis=1)
                patches.append(rolled)
        # (K*K*Cin_pad, HW); halo zeroing via one multiply by the static mask.
        cols.append(jnp.concatenate(patches, axis=0) * mask_ref[...])
    im2col = jnp.concatenate(cols, axis=1)                      # (KKC, B_blk*HW)

    # Single MXU matmul over the whole batch block, then ReLU.
    conv = jnp.dot(w_ref[...].astype(jnp.float32), im2col,
                   preferred_element_type=jnp.float32)          # (Cout, B_blk*HW)
    conv = jnp.maximum(conv, 0.0)

    # Two direct stores per batch element (no (Cin+Cout)-row concat relayout);
    # passthrough channels copied in the original dtype (no f32 round trip).
    for b in range(B_blk):
        out_ref[b, :Cin, :] = x_ref[b, :Cin, :]
        out_ref[b, Cin:, :] = conv[:, b * HW:(b + 1) * HW].astype(out_ref.dtype)


def _build_halo_mask(H, W, K, pad, Cin_pad, dtype=jnp.float32):
    """Static (K*K*Cin_pad, H*W) validity mask, rows ordered (kh, kw, cin)."""
    h = jnp.arange(H).reshape(H, 1)
    w = jnp.arange(W).reshape(1, W)
    rows = []
    for kh in range(K):
        for kw in range(K):
            dh, dw = kh - pad, kw - pad
            valid = ((h + dh >= 0) & (h + dh < H) &
                     (w + dw >= 0) & (w + dw < W)).reshape(1, H * W)
            rows.append(jnp.broadcast_to(valid, (Cin_pad, H * W)))
    return jnp.concatenate(rows, axis=0).astype(dtype)


def one_conv_forward(x_nchw, w_oihw):
    """Equivalent of one_conv.forward: cat((x, relu(conv(x))), dim=1). NCHW in/out."""
    N, Cin, H, W = x_nchw.shape
    Cout, _, K, _ = w_oihw.shape
    pad = K // 2
    HW = H * W
    Cin_pad = ((Cin + 7) // 8) * 8          # sublane-align the im2col rows
    KKC = K * K * Cin_pad

    # Whole batch in a single grid step: at these shapes the per-step fixed
    # cost dominates, so fold the batch into one wide MXU matmul.
    B_blk = N
    grid = (pl.cdiv(N, B_blk),)

    # Free reshape NCHW -> (N, Cin, H*W), then a few-KB channel pad to Cin_pad.
    x_flat = x_nchw.reshape(N, Cin, HW)
    x_pad = jnp.pad(x_flat, ((0, 0), (0, Cin_pad - Cin), (0, 0)))

    # Tiny weight repack: (Cout, Cin, K, K) -> (Cout, K*K*Cin_pad),
    # column ordering (kh, kw, cin) with zero columns for padded cin.
    w_kkc = jnp.transpose(w_oihw, (0, 2, 3, 1))
    w_kkc = jnp.pad(w_kkc, ((0, 0), (0, 0), (0, 0), (0, Cin_pad - Cin)))
    w2d = w_kkc.reshape(Cout, KKC)

    mask = _build_halo_mask(H, W, K, pad, Cin_pad)

    kern = partial(_one_conv_kernel, H=H, W=W, Cin=Cin, Cin_pad=Cin_pad,
                   Cout=Cout, K=K, pad=pad, B_blk=B_blk)

    out_flat = pl.pallas_call(
        kern,
        out_shape=jax.ShapeDtypeStruct((N, Cin + Cout, HW), x_nchw.dtype),
        grid=grid,
        in_specs=[
            pl.BlockSpec((KKC, HW), lambda n: (0, 0)),             # resident mask
            pl.BlockSpec((B_blk, Cin_pad, HW), lambda n: (n, 0, 0)),
            pl.BlockSpec((Cout, KKC), lambda n: (0, 0)),           # resident weights
        ],
        out_specs=pl.BlockSpec((B_blk, Cin + Cout, HW), lambda n: (n, 0, 0)),
        compiler_params=pltpu.CompilerParams(dimension_semantics=("parallel",)),
    )(mask, x_pad, w2d)

    # Free reshape back to NCHW.
    return out_flat.reshape(N, Cin + Cout, H, W)


# One jit over the whole forward: x pad, weight repack and the pallas_call are
# compiled/fused together (no per-call standalone XLA ops for the repack).
one_conv_forward_jit = jax.jit(one_conv_forward)


def one_conv_reference(x_nchw, w_oihw):
    """Pure-JAX reference (lax conv) for correctness checking."""
    conv = lax.conv_general_dilated(
        x_nchw, w_oihw,
        window_strides=(1, 1),
        padding="SAME",
        dimension_numbers=("NCHW", "OIHW", "NCHW"),
    )
    return jnp.concatenate([x_nchw, jnp.maximum(conv, 0.0)], axis=1)


if __name__ == "__main__":
    # Small shapes consistent with the module: N=2, inchanels=4, growth_rate=8, 16x16.
    N, Cin, Cout, H, W, K = 2, 4, 8, 16, 16, 3

    key = jax.random.PRNGKey(0)
    kx, kw = jax.random.split(key)
    x = jax.random.normal(kx, (N, Cin, H, W), dtype=jnp.float32)
    w = jax.random.normal(kw, (Cout, Cin, K, K), dtype=jnp.float32) * 0.1

    out = one_conv_forward_jit(x, w)
    out = jax.block_until_ready(out)

    ref = one_conv_reference(x, w)
    assert out.shape == (N, Cin + Cout, H, W), out.shape
    assert jnp.allclose(out, ref, atol=1e-5, rtol=1e-5), "mismatch vs reference"

    print("KERNEL_OK")
</pallas_src>

<mosaic_0001>
module attributes {stable_mosaic.version = 11 : i64} {
  func.func @_one_conv_kernel(%arg0: i32, %arg1: memref<72x256xf32, #tpu.memory_space<vmem>>, %arg2: memref<2x8x256xf32, #tpu.memory_space<vmem>>, %arg3: memref<8x72xf32, #tpu.memory_space<vmem>>, %arg4: memref<2x12x256xf32, #tpu.memory_space<vmem>>) attributes {dimension_semantics = [#tpu.dimension_semantics<parallel>], iteration_bounds = array<i64: 1>, scalar_prefetch = 0 : i64, scratch_operands = 0 : i64, tpu.core_type = #tpu.core_type<tc>, window_params = [{pipeline_mode = #tpu.pipeline_mode<synchronous>, transform_indices = @transform_0, window_bounds = array<i64: 72, 256>}, {transform_indices = @transform_1, window_bounds = array<i64: 2, 8, 256>}, {pipeline_mode = #tpu.pipeline_mode<synchronous>, transform_indices = @transform_2, window_bounds = array<i64: 8, 72>}, {transform_indices = @transform_3, window_bounds = array<i64: 2, 12, 256>}]} {
    %c0 = arith.constant 0 : index
    %c0_0 = arith.constant 0 : index
    %c0_1 = arith.constant 0 : index
    %0 = vector.load %arg2[%c0, %c0_0, %c0_1] : memref<2x8x256xf32, #tpu.memory_space<vmem>>, vector<1x8x256xf32>
    %1 = vector.shape_cast %0 : vector<1x8x256xf32> to vector<8x256xf32>
    %c17_i32 = arith.constant 17 : i32
    %2 = tpu.dynamic_rotate %1 by %c17_i32 dim 1 : vector<8x256xf32>, i32 -> vector<8x256xf32>
    %c16_i32 = arith.constant 16 : i32
    %3 = tpu.dynamic_rotate %1 by %c16_i32 dim 1 : vector<8x256xf32>, i32 -> vector<8x256xf32>
    %c15_i32 = arith.constant 15 : i32
    %4 = tpu.dynamic_rotate %1 by %c15_i32 dim 1 : vector<8x256xf32>, i32 -> vector<8x256xf32>
    %c1_i32 = arith.constant 1 : i32
    %5 = tpu.dynamic_rotate %1 by %c1_i32 dim 1 : vector<8x256xf32>, i32 -> vector<8x256xf32>
    %c255_i32 = arith.constant 255 : i32
    %6 = tpu.dynamic_rotate %1 by %c255_i32 dim 1 : vector<8x256xf32>, i32 -> vector<8x256xf32>
    %c241_i32 = arith.constant 241 : i32
    %7 = tpu.dynamic_rotate %1 by %c241_i32 dim 1 : vector<8x256xf32>, i32 -> vector<8x256xf32>
    %c240_i32 = arith.constant 240 : i32
    %8 = tpu.dynamic_rotate %1 by %c240_i32 dim 1 : vector<8x256xf32>, i32 -> vector<8x256xf32>
    %c239_i32 = arith.constant 239 : i32
    %9 = tpu.dynamic_rotate %1 by %c239_i32 dim 1 : vector<8x256xf32>, i32 -> vector<8x256xf32>
    %10 = tpu.concatenate %2, %3, %4, %5, %1, %6, %7, %8, %9 in 0 : vector<8x256xf32>, vector<8x256xf32>, vector<8x256xf32>, vector<8x256xf32>, vector<8x256xf32>, vector<8x256xf32>, vector<8x256xf32>, vector<8x256xf32>, vector<8x256xf32> -> vector<72x256xf32>
    %c0_2 = arith.constant 0 : index
    %c0_3 = arith.constant 0 : index
    %11 = vector.load %arg1[%c0_2, %c0_3] : memref<72x256xf32, #tpu.memory_space<vmem>>, vector<72x256xf32>
    %12 = arith.mulf %10, %11 : vector<72x256xf32>
    %c1 = arith.constant 1 : index
    %c0_4 = arith.constant 0 : index
    %c0_5 = arith.constant 0 : index
    %13 = vector.load %arg2[%c1, %c0_4, %c0_5] : memref<2x8x256xf32, #tpu.memory_space<vmem>>, vector<1x8x256xf32>
    %14 = vector.shape_cast %13 : vector<1x8x256xf32> to vector<8x256xf32>
    %c17_i32_6 = arith.constant 17 : i32
    %15 = tpu.dynamic_rotate %14 by %c17_i32_6 dim 1 : vector<8x256xf32>, i32 -> vector<8x256xf32>
    %c16_i32_7 = arith.constant 16 : i32
    %16 = tpu.dynamic_rotate %14 by %c16_i32_7 dim 1 : vector<8x256xf32>, i32 -> vector<8x256xf32>
    %c15_i32_8 = arith.constant 15 : i32
    %17 = tpu.dynamic_rotate %14 by %c15_i32_8 dim 1 : vector<8x256xf32>, i32 -> vector<8x256xf32>
    %c1_i32_9 = arith.constant 1 : i32
    %18 = tpu.dynamic_rotate %14 by %c1_i32_9 dim 1 : vector<8x256xf32>, i32 -> vector<8x256xf32>
    %c255_i32_10 = arith.constant 255 : i32
    %19 = tpu.dynamic_rotate %14 by %c255_i32_10 dim 1 : vector<8x256xf32>, i32 -> vector<8x256xf32>
    %c241_i32_11 = arith.constant 241 : i32
    %20 = tpu.dynamic_rotate %14 by %c241_i32_11 dim 1 : vector<8x256xf32>, i32 -> vector<8x256xf32>
    %c240_i32_12 = arith.constant 240 : i32
    %21 = tpu.dynamic_rotate %14 by %c240_i32_12 dim 1 : vector<8x256xf32>, i32 -> vector<8x256xf32>
    %c239_i32_13 = arith.constant 239 : i32
    %22 = tpu.dynamic_rotate %14 by %c239_i32_13 dim 1 : vector<8x256xf32>, i32 -> vector<8x256xf32>
    %23 = tpu.concatenate %15, %16, %17, %18, %14, %19, %20, %21, %22 in 0 : vector<8x256xf32>, vector<8x256xf32>, vector<8x256xf32>, vector<8x256xf32>, vector<8x256xf32>, vector<8x256xf32>, vector<8x256xf32>, vector<8x256xf32>, vector<8x256xf32> -> vector<72x256xf32>
    %c0_14 = arith.constant 0 : index
    %c0_15 = arith.constant 0 : index
    %24 = vector.load %arg1[%c0_14, %c0_15] : memref<72x256xf32, #tpu.memory_space<vmem>>, vector<72x256xf32>
    %25 = arith.mulf %23, %24 : vector<72x256xf32>
    %26 = tpu.concatenate %12, %25 in 1 : vector<72x256xf32>, vector<72x256xf32> -> vector<72x512xf32>
    %c0_16 = arith.constant 0 : index
    %c0_17 = arith.constant 0 : index
    %27 = vector.load %arg3[%c0_16, %c0_17] : memref<8x72xf32, #tpu.memory_space<vmem>>, vector<8x72xf32>
    %cst = arith.constant dense<0.000000e+00> : vector<8x512xf32>
    %28 = tpu.matmul %27, %26, %cst {dimension_numbers = #tpu.dot_dimension_numbers<[1], [0], [0], [1], [0, 0, 1, 1], [], []>} : vector<8x72xf32>, vector<72x512xf32>, vector<8x512xf32> -> vector<8x512xf32>
    %cst_18 = arith.constant 0.000000e+00 : f32
    %29 = vector.broadcast %cst_18 : f32 to vector<8x512xf32>
    %30 = arith.maximumf %28, %29 : vector<8x512xf32>
    %c0_19 = arith.constant 0 : index
    %c0_20 = arith.constant 0 : index
    %c0_21 = arith.constant 0 : index
    %31 = vector.load %arg2[%c0_19, %c0_20, %c0_21] : memref<2x8x256xf32, #tpu.memory_space<vmem>>, vector<1x4x256xf32>
    %32 = vector.shape_cast %31 : vector<1x4x256xf32> to vector<4x256xf32>
    %c0_22 = arith.constant 0 : index
    %c0_23 = arith.constant 0 : index
    %c0_24 = arith.constant 0 : index
    %33 = vector.load %arg4[%c0_22, %c0_23, %c0_24] : memref<2x12x256xf32, #tpu.memory_space<vmem>>, vector<1x4x256xf32>
    %34 = vector.shape_cast %33 : vector<1x4x256xf32> to vector<4x256xf32>
    %35 = vector.shape_cast %32 : vector<4x256xf32> to vector<1x4x256xf32>
    tpu.vector_store %arg4[%c0_22, %c0_23, %c0_24], %35 {strides = array<i32>} : memref<2x12x256xf32, #tpu.memory_space<vmem>>, vector<1x4x256xf32>,
    %36 = vector.extract_strided_slice %30 {offsets = [0, 0], sizes = [8, 256], strides = [1, 1]} : vector<8x512xf32> to vector<8x256xf32>
    %c0_25 = arith.constant 0 : index
    %c4 = arith.constant 4 : index
    %c0_26 = arith.constant 0 : index
    %37 = vector.load %arg4[%c0_25, %c4, %c0_26] : memref<2x12x256xf32, #tpu.memory_space<vmem>>, vector<1x8x256xf32>
    %38 = vector.shape_cast %37 : vector<1x8x256xf32> to vector<8x256xf32>
    %39 = vector.shape_cast %36 : vector<8x256xf32> to vector<1x8x256xf32>
    tpu.vector_store %arg4[%c0_25, %c4, %c0_26], %39 {strides = array<i32>} : memref<2x12x256xf32, #tpu.memory_space<vmem>>, vector<1x8x256xf32>,
    %c1_27 = arith.constant 1 : index
    %c0_28 = arith.constant 0 : index
    %c0_29 = arith.constant 0 : index
    %40 = vector.load %arg2[%c1_27, %c0_28, %c0_29] : memref<2x8x256xf32, #tpu.memory_space<vmem>>, vector<1x4x256xf32>
    %41 = vector.shape_cast %40 : vector<1x4x256xf32> to vector<4x256xf32>
    %c1_30 = arith.constant 1 : index
    %c0_31 = arith.constant 0 : index
    %c0_32 = arith.constant 0 : index
    %42 = vector.load %arg4[%c1_30, %c0_31, %c0_32] : memref<2x12x256xf32, #tpu.memory_space<vmem>>, vector<1x4x256xf32>
    %43 = vector.shape_cast %42 : vector<1x4x256xf32> to vector<4x256xf32>
    %44 = vector.shape_cast %41 : vector<4x256xf32> to vector<1x4x256xf32>
    tpu.vector_store %arg4[%c1_30, %c0_31, %c0_32], %44 {strides = array<i32>} : memref<2x12x256xf32, #tpu.memory_space<vmem>>, vector<1x4x256xf32>,
    %45 = vector.extract_strided_slice %30 {offsets = [0, 256], sizes = [8, 256], strides = [1, 1]} : vector<8x512xf32> to vector<8x256xf32>
    %c1_33 = arith.constant 1 : index
    %c4_34 = arith.constant 4 : index
    %c0_35 = arith.constant 0 : index
    %46 = vector.load %arg4[%c1_33, %c4_34, %c0_35] : memref<2x12x256xf32, #tpu.memory_space<vmem>>, vector<1x8x256xf32>
    %47 = vector.shape_cast %46 : vector<1x8x256xf32> to vector<8x256xf32>
    %48 = vector.shape_cast %45 : vector<8x256xf32> to vector<1x8x256xf32>
    tpu.vector_store %arg4[%c1_33, %c4_34, %c0_35], %48 {strides = array<i32>} : memref<2x12x256xf32, #tpu.memory_space<vmem>>, vector<1x8x256xf32>,
    return
  }
  func.func @transform_0(%arg0: i32) -> (i32, i32) {
    %c0_i32 = arith.constant 0 : i32
    %c0_i32_0 = arith.constant 0 : i32
    %c0_i32_1 = arith.constant 0 : i32
    return %c0_i32, %c0_i32_0 : i32, i32
  }
  func.func @transform_1(%arg0: i32) -> (i32, i32, i32) {
    %c0_i32 = arith.constant 0 : i32
    %c0_i32_0 = arith.constant 0 : i32
    %c0_i32_1 = arith.constant 0 : i32
    return %arg0, %c0_i32, %c0_i32_0 : i32, i32, i32
  }
  func.func @transform_2(%arg0: i32) -> (i32, i32) {
    %c0_i32 = arith.constant 0 : i32
    %c0_i32_0 = arith.constant 0 : i32
    %c0_i32_1 = arith.constant 0 : i32
    return %c0_i32, %c0_i32_0 : i32, i32
  }
  func.func @transform_3(%arg0: i32) -> (i32, i32, i32) {
    %c0_i32 = arith.constant 0 : i32
    %c0_i32_0 = arith.constant 0 : i32
    %c0_i32_1 = arith.constant 0 : i32
    return %arg0, %c0_i32, %c0_i32_0 : i32, i32, i32
  }
}

</mosaic_0001>

<llo_original>
// kernel: one_conv_forward.1
$region0: #{one_conv_forward.1}
  #allocation0 [shape = 'u32[]', space=smem, size = 0x4, offset = 0x4, fixed_abs, tag = 'smem constant byte address 0x4 - core index']
  #allocation1 [shape = 'u32[144,128]{1,0:T(1,128)}', space=vmem, size = 0x12000, scoped, tag = 'internal scratch']
  %s0 = inlined_call_operand.vmem [shape: f32[72,256], index: 0, kind: input, shape index: {}]
  %s1 = inlined_call_operand.vmem [shape: f32[2,8,256], index: 1, kind: input, shape index: {}]
  %s2 = inlined_call_operand.vmem [shape: f32[8,72], index: 2, kind: input, shape index: {}]
  %s3 = inlined_call_operand.vmem [shape: f32[2,12,256], index: 3, kind: output, shape index: {}]
  %s4 = sld [smem:[#allocation0]]
  $region22: #{one_conv_forward.1} parent=0
    _
  %s6 = ssub.s32 1, %s4
  %s7 = scalar_select 0, %s6, %s4
  // Predicated region
  $region2: #{one_conv_forward.1} parent=0 // pred_check
    _
  $region3: #{one_conv_forward.1} parent=0 // pred_check_branch
    %9 = sbr.rel (0) target = $region5
  $region4: #{one_conv_forward.1} parent=0 // pred_region
    _
  $region5: #{one_conv_forward.1} parent=0 // pred_fallthru
    _
  // Predicated region
  $region6: #{one_conv_forward.1} parent=0 // pred_check
    _
  $region7: #{one_conv_forward.1} parent=0 // pred_check_branch
    %11 = sbr.rel (0) target = $region9
  $region8: #{one_conv_forward.1} parent=0 // pred_region
    _
  $region9: #{one_conv_forward.1} parent=0 // pred_fallthru
    _
  // Predicated region
  $region10: #{one_conv_forward.1} parent=0 // pred_check
    _
  $region11: #{one_conv_forward.1} parent=0 // pred_check_branch
    %13 = sbr.rel (0) target = $region13
  $region12: #{one_conv_forward.1} parent=0 // pred_region
    _
  $region13: #{one_conv_forward.1} parent=0 // pred_fallthru
    _
  %v14 = vld [vmem:[%s1] sm:$0xff]
  %v15 = vld [vmem:[%s1 + $0x8] sm:$0xff]
  %16 = vrot.lane.b32.xlu0 %v14, 17
  %v17 = vpop.permute.xlu0 %16
  %18 = vrot.lane.b32.xlu0 %v15, 17
  %v19 = vpop.permute.xlu0 %18
  %v20 = vlaneseq
  %v21 = vand.u32 %v20, 127
  %vm22 = vcmp.lt.s32.totalorder %v21, 17
  %v23 = vsel %vm22, %v17, %v19
  %v24 = vsel %vm22, %v19, %v17
  %25 = vrot.lane.b32.xlu0 %v14, 16
  %v26 = vpop.permute.xlu0 %25
  %27 = vrot.lane.b32.xlu0 %v15, 16
  %v28 = vpop.permute.xlu0 %27
  %vm29 = vcmp.lt.s32.totalorder %v21, 16
  %v30 = vsel %vm29, %v26, %v28
  %v31 = vsel %vm29, %v28, %v26
  %32 = vrot.lane.b32.xlu0 %v14, 15
  %v33 = vpop.permute.xlu0 %32
  %34 = vrot.lane.b32.xlu0 %v15, 15
  %v35 = vpop.permute.xlu0 %34
  %vm36 = vcmp.lt.s32.totalorder %v21, 15
  %v37 = vsel %vm36, %v33, %v35
  %v38 = vsel %vm36, %v35, %v33
  %39 = vrot.lane.b32.xlu0 %v14, 1
  %v40 = vpop.permute.xlu0 %39
  %41 = vrot.lane.b32.xlu0 %v15, 1
  %v42 = vpop.permute.xlu0 %41
  %vm43 = vcmp.lt.s32.totalorder %v21, 1
  %v44 = vsel %vm43, %v40, %v42
  %v45 = vsel %vm43, %v42, %v40
  %46 = vrot.lane.b32.xlu0 %v14, 127
  %v47 = vpop.permute.xlu0 %46
  %48 = vrot.lane.b32.xlu0 %v15, 127
  %v49 = vpop.permute.xlu0 %48
  %vm50 = vcmp.lt.s32.totalorder %v21, 127
  %v51 = vsel %vm50, %v47, %v49
  %v52 = vsel %vm50, %v49, %v47
  %53 = vrot.lane.b32.xlu0 %v14, 113
  %v54 = vpop.permute.xlu0 %53
  %55 = vrot.lane.b32.xlu0 %v15, 113
  %v56 = vpop.permute.xlu0 %55
  %vm57 = vcmp.lt.s32.totalorder %v21, 113
  %v58 = vsel %vm57, %v54, %v56
  %v59 = vsel %vm57, %v56, %v54
  %60 = vrot.lane.b32.xlu0 %v14, 112
  %v61 = vpop.permute.xlu0 %60
  %62 = vrot.lane.b32.xlu0 %v15, 112
  %v63 = vpop.permute.xlu0 %62
  %vm64 = vcmp.lt.s32.totalorder %v21, 112
  %v65 = vsel %vm64, %v61, %v63
  %v66 = vsel %vm64, %v63, %v61
  %67 = vrot.lane.b32.xlu0 %v14, 111
  %v68 = vpop.permute.xlu0 %67
  %69 = vrot.lane.b32.xlu0 %v15, 111
  %v70 = vpop.permute.xlu0 %69
  %vm71 = vcmp.lt.s32.totalorder %v21, 111
  %v72 = vsel %vm71, %v68, %v70
  %v73 = vsel %vm71, %v70, %v68
  %v74 = vld [vmem:[%s0] sm:$0xff]
  %v75 = vld [vmem:[%s0 + $0x8] sm:$0xff]
  %v76 = vld [vmem:[%s0 + $0x10] sm:$0xff]
  %v77 = vld [vmem:[%s0 + $0x18] sm:$0xff]
  %v78 = vld [vmem:[%s0 + $0x20] sm:$0xff]
  %v79 = vld [vmem:[%s0 + $0x28] sm:$0xff]
  %v80 = vld [vmem:[%s0 + $0x30] sm:$0xff]
  %v81 = vld [vmem:[%s0 + $0x38] sm:$0xff]
  %v82 = vld [vmem:[%s0 + $0x40] sm:$0xff]
  %v83 = vld [vmem:[%s0 + $0x48] sm:$0xff]
  %v84 = vld [vmem:[%s0 + $0x50] sm:$0xff]
  %v85 = vld [vmem:[%s0 + $0x58] sm:$0xff]
  %v86 = vld [vmem:[%s0 + $0x60] sm:$0xff]
  %v87 = vld [vmem:[%s0 + $0x68] sm:$0xff]
  %v88 = vld [vmem:[%s0 + $0x70] sm:$0xff]
  %v89 = vld [vmem:[%s0 + $0x78] sm:$0xff]
  %v90 = vld [vmem:[%s0 + $0x80] sm:$0xff]
  %v91 = vld [vmem:[%s0 + $0x88] sm:$0xff]
  %v92 = vmul.f32 %v24, %v74
  %v93 = vmul.f32 %v23, %v75
  %v94 = vmul.f32 %v31, %v76
  %v95 = vmul.f32 %v30, %v77
  %v96 = vmul.f32 %v38, %v78
  %v97 = vmul.f32 %v37, %v79
  %v98 = vmul.f32 %v45, %v80
  %v99 = vmul.f32 %v44, %v81
  %v100 = vmul.f32 %v14, %v82
  %v101 = vmul.f32 %v15, %v83
  %v102 = vmul.f32 %v51, %v84
  %v103 = vmul.f32 %v52, %v85
  %v104 = vmul.f32 %v58, %v86
  %v105 = vmul.f32 %v59, %v87
  %v106 = vmul.f32 %v65, %v88
  %v107 = vmul.f32 %v66, %v89
  %v108 = vmul.f32 %v72, %v90
  %v109 = vmul.f32 %v73, %v91
  %s110 = scalar_lea.vmem %s1, 16
  %v111 = vld [vmem:[%s110] sm:$0xff]
  %v112 = vld [vmem:[%s110 + $0x8] sm:$0xff]
  %113 = vrot.lane.b32.xlu0 %v111, 17
  %v114 = vpop.permute.xlu0 %113
  %115 = vrot.lane.b32.xlu0 %v112, 17
  %v116 = vpop.permute.xlu0 %115
  %v117 = vsel %vm22, %v114, %v116
  %v118 = vsel %vm22, %v116, %v114
  %119 = vrot.lane.b32.xlu0 %v111, 16
  %v120 = vpop.permute.xlu0 %119
  %121 = vrot.lane.b32.xlu0 %v112, 16
  %v122 = vpop.permute.xlu0 %121
  %v123 = vsel %vm29, %v120, %v122
  %v124 = vsel %vm29, %v122, %v120
  %125 = vrot.lane.b32.xlu0 %v111, 15
  %v126 = vpop.permute.xlu0 %125
  %127 = vrot.lane.b32.xlu0 %v112, 15
  %v128 = vpop.permute.xlu0 %127
  %v129 = vsel %vm36, %v126, %v128
  %v130 = vsel %vm36, %v128, %v126
  %131 = vrot.lane.b32.xlu0 %v111, 1
  %v132 = vpop.permute.xlu0 %131
  %133 = vrot.lane.b32.xlu0 %v112, 1
  %v134 = vpop.permute.xlu0 %133
  %v135 = vsel %vm43, %v132, %v134
  %v136 = vsel %vm43, %v134, %v132
  %137 = vrot.lane.b32.xlu0 %v111, 127
  %v138 = vpop.permute.xlu0 %137
  %139 = vrot.lane.b32.xlu0 %v112, 127
  %v140 = vpop.permute.xlu0 %139
  %v141 = vsel %vm50, %v138, %v140
  %v142 = vsel %vm50, %v140, %v138
  %143 = vrot.lane.b32.xlu0 %v111, 113
  %v144 = vpop.permute.xlu0 %143
  %145 = vrot.lane.b32.xlu0 %v112, 113
  %v146 = vpop.permute.xlu0 %145
  %v147 = vsel %vm57, %v144, %v146
  %v148 = vsel %vm57, %v146, %v144
  %149 = vrot.lane.b32.xlu0 %v111, 112
  %v150 = vpop.permute.xlu0 %149
  %151 = vrot.lane.b32.xlu0 %v112, 112
  %v152 = vpop.permute.xlu0 %151
  %v153 = vsel %vm64, %v150, %v152
  %v154 = vsel %vm64, %v152, %v150
  %155 = vrot.lane.b32.xlu0 %v111, 111
  %v156 = vpop.permute.xlu0 %155
  %157 = vrot.lane.b32.xlu0 %v112, 111
  %v158 = vpop.permute.xlu0 %157
  %v159 = vsel %vm71, %v156, %v158
  %v160 = vsel %vm71, %v158, %v156
  %v161 = vmul.f32 %v118, %v74
  %v162 = vmul.f32 %v117, %v75
  %v163 = vmul.f32 %v124, %v76
  %v164 = vmul.f32 %v123, %v77
  %v165 = vmul.f32 %v130, %v78
  %v166 = vmul.f32 %v129, %v79
  %v167 = vmul.f32 %v136, %v80
  %v168 = vmul.f32 %v135, %v81
  %v169 = vmul.f32 %v111, %v82
  %v170 = vmul.f32 %v112, %v83
  %v171 = vmul.f32 %v141, %v84
  %v172 = vmul.f32 %v142, %v85
  %v173 = vmul.f32 %v147, %v86
  %v174 = vmul.f32 %v148, %v87
  %v175 = vmul.f32 %v153, %v88
  %v176 = vmul.f32 %v154, %v89
  %v177 = vmul.f32 %v159, %v90
  %v178 = vmul.f32 %v160, %v91
  %v179 = vld [vmem:[%s2] sm:$0xff]
  %vm180 = vcmask 588800
  %v182 = vsel %vm180, %v179, 0
  %184 = vmatprep.subr.mxu0 0.0
  %185 = vmatpush1.msra.mxu0 0.0
  %186 = vmatprep.subr.mxu0 0.0
  %187 = vmatpush1.msra.mxu0 0.0
  %188 = vmatprep.subr.mxu0 0.0
  %189 = vmatpush1.msra.mxu0 0.0
  %190 = vmatprep.subr.mxu0 0.0
  %191 = vmatpush1.msra.mxu0 0.0
  %192 = vmatprep.subr.mxu0 0.0
  %193 = vmatpush1.msra.mxu0 0.0
  %194 = vmatprep.subr.mxu0 0.0
  %195 = vmatpush1.msra.mxu0 0.0
  %196 = vmatprep.subr.mxu0 0.0
  %197 = vmatpush1.msra.mxu0 0.0
  %198 = vmatprep.subr.mxu0 %v109
  %199 = vmatpush1.msra.mxu0 %v108
  %200 = vmatprep.subr.mxu0 %v107
  %201 = vmatpush1.msra.mxu0 %v106
  %202 = vmatprep.subr.mxu0 %v105
  %203 = vmatpush1.msra.mxu0 %v104
  %204 = vmatprep.subr.mxu0 %v103
  %205 = vmatpush1.msra.mxu0 %v102
  %206 = vmatprep.subr.mxu0 %v101
  %207 = vmatpush1.msra.mxu0 %v100
  %208 = vmatprep.subr.mxu0 %v99
  %209 = vmatpush1.msra.mxu0 %v98
  %210 = vmatprep.subr.mxu0 %v97
  %211 = vmatpush1.msra.mxu0 %v96
  %212 = vmatprep.subr.mxu0 %v95
  %213 = vmatpush1.msra.mxu0 %v94
  %214 = vmatprep.subr.mxu0 %v93
  %215 = vmatpush1.msra.mxu0 %v92
  %216 = vmatprep.subr.mxu0 0.0
  %217 = vmatpush2.msra.mxu0 0.0
  %218 = vmatprep.subr.mxu0 0.0
  %219 = vmatpush2.msra.mxu0 0.0
  %220 = vmatprep.subr.mxu0 0.0
  %221 = vmatpush2.msra.mxu0 0.0
  %222 = vmatprep.subr.mxu0 0.0
  %223 = vmatpush2.msra.mxu0 0.0
  %224 = vmatprep.subr.mxu0 0.0
  %225 = vmatpush2.msra.mxu0 0.0
  %226 = vmatprep.subr.mxu0 0.0
  %227 = vmatpush2.msra.mxu0 0.0
  %228 = vmatprep.subr.mxu0 0.0
  %229 = vmatpush2.msra.mxu0 0.0
  %230 = vmatprep.subr.mxu0 0.0
  %231 = vmatpush2.msra.mxu0 0.0
  %232 = vmatprep.subr.mxu0 0.0
  %233 = vmatpush2.msra.mxu0 0.0
  %234 = vmatprep.subr.mxu0 0.0
  %235 = vmatpush2.msra.mxu0 0.0
  %236 = vmatprep.subr.mxu0 0.0
  %237 = vmatpush2.msra.mxu0 0.0
  %238 = vmatprep.subr.mxu0 0.0
  %239 = vmatpush2.msra.mxu0 0.0
  %240 = vmatprep.subr.mxu0 0.0
  %241 = vmatpush2.msra.mxu0 0.0
  %242 = vmatprep.subr.mxu0 0.0
  %243 = vmatpush2.msra.mxu0 0.0
  %244 = vmatprep.subr.mxu0 0.0
  %245 = vmatpush2.msra.mxu0 0.0
  %246 = vmatprep.subr.mxu0 0.0
  %247 = vmatpush2.msra.mxu0 0.0
  %248 = vmatprep.mubr.f32.mxu0 0.0
  %249 = vmatmul.mubr.f32.gmra.mxu0 %v182
  %v250 = vpop.f32.mrf.mxu0
  %v251 = vadd.f32 0.0, %v250
  %v252 = vpop.f32.mrf.mxu0
  %v253 = vadd.f32 0.0, %v252
  %254 = vdwg.mxu0
  %255 = vmatprep.subr.mxu0 0.0
  %256 = vmatpush1.msra.mxu0 0.0
  %257 = vmatprep.subr.mxu0 0.0
  %258 = vmatpush1.msra.mxu0 0.0
  %259 = vmatprep.subr.mxu0 0.0
  %260 = vmatpush1.msra.mxu0 0.0
  %261 = vmatprep.subr.mxu0 0.0
  %262 = vmatpush1.msra.mxu0 0.0
  %263 = vmatprep.subr.mxu0 0.0
  %264 = vmatpush1.msra.mxu0 0.0
  %265 = vmatprep.subr.mxu0 0.0
  %266 = vmatpush1.msra.mxu0 0.0
  %267 = vmatprep.subr.mxu0 0.0
  %268 = vmatpush1.msra.mxu0 0.0
  %269 = vmatprep.subr.mxu0 %v178
  %270 = vmatpush1.msra.mxu0 %v177
  %271 = vmatprep.subr.mxu0 %v176
  %272 = vmatpush1.msra.mxu0 %v175
  %273 = vmatprep.subr.mxu0 %v174
  %274 = vmatpush1.msra.mxu0 %v173
  %275 = vmatprep.subr.mxu0 %v172
  %276 = vmatpush1.msra.mxu0 %v171
  %277 = vmatprep.subr.mxu0 %v170
  %278 = vmatpush1.msra.mxu0 %v169
  %279 = vmatprep.subr.mxu0 %v168
  %280 = vmatpush1.msra.mxu0 %v167
  %281 = vmatprep.subr.mxu0 %v166
  %282 = vmatpush1.msra.mxu0 %v165
  %283 = vmatprep.subr.mxu0 %v164
  %284 = vmatpush1.msra.mxu0 %v163
  %285 = vmatprep.subr.mxu0 %v162
  %286 = vmatpush1.msra.mxu0 %v161
  %287 = vmatprep.subr.mxu0 0.0
  %288 = vmatpush2.msra.mxu0 0.0
  %289 = vmatprep.subr.mxu0 0.0
  %290 = vmatpush2.msra.mxu0 0.0
  %291 = vmatprep.subr.mxu0 0.0
  %292 = vmatpush2.msra.mxu0 0.0
  %293 = vmatprep.subr.mxu0 0.0
  %294 = vmatpush2.msra.mxu0 0.0
  %295 = vmatprep.subr.mxu0 0.0
  %296 = vmatpush2.msra.mxu0 0.0
  %297 = vmatprep.subr.mxu0 0.0
  %298 = vmatpush2.msra.mxu0 0.0
  %299 = vmatprep.subr.mxu0 0.0
  %300 = vmatpush2.msra.mxu0 0.0
  %301 = vmatprep.subr.mxu0 0.0
  %302 = vmatpush2.msra.mxu0 0.0
  %303 = vmatprep.subr.mxu0 0.0
  %304 = vmatpush2.msra.mxu0 0.0
  %305 = vmatprep.subr.mxu0 0.0
  %306 = vmatpush2.msra.mxu0 0.0
  %307 = vmatprep.subr.mxu0 0.0
  %308 = vmatpush2.msra.mxu0 0.0
  %309 = vmatprep.subr.mxu0 0.0
  %310 = vmatpush2.msra.mxu0 0.0
  %311 = vmatprep.subr.mxu0 0.0
  %312 = vmatpush2.msra.mxu0 0.0
  %313 = vmatprep.subr.mxu0 0.0
  %314 = vmatpush2.msra.mxu0 0.0
  %315 = vmatprep.subr.mxu0 0.0
  %316 = vmatpush2.msra.mxu0 0.0
  %317 = vmatprep.subr.mxu0 0.0
  %318 = vmatpush2.msra.mxu0 0.0
  %319 = vmatprep.mubr.f32.mxu0 0.0
  %320 = vmatmul.mubr.f32.gmra.mxu0 %v182
  %v321 = vpop.f32.mrf.mxu0
  %v322 = vadd.f32 0.0, %v321
  %v323 = vpop.f32.mrf.mxu0
  %v324 = vadd.f32 0.0, %v323
  %325 = vdwg.mxu0
  %v326 = vmax.f32 %v251, 0.0
  %v327 = vmax.f32 %v253, 0.0
  %v328 = vmax.f32 %v322, 0.0
  %v329 = vmax.f32 %v324, 0.0
  %v330 = vld [vmem:[%s1] sm:$0xf]
  %v331 = vld [vmem:[%s1 + $0x8] sm:$0xf]
  %332 = vst [vmem:[%s3] sm:$0xf] %v330
  %333 = vst [vmem:[%s3 + $0x8] sm:$0xf] %v331
  %v336 = vrot.slane %v326, 4
  %v337 = vrot.slane %v327, 4
  %340 = vst [vmem:[%s3] sm:$0xf0] %v336
  %341 = vst [vmem:[%s3 + $0x8] sm:$0xf0] %v337
  %342 = vst [vmem:[%s3 + $0x10] sm:$0xf] %v336
  %343 = vst [vmem:[%s3 + $0x18] sm:$0xf] %v337
  %v344 = vld [vmem:[%s110] sm:$0xf]
  %v345 = vld [vmem:[%s110 + $0x8] sm:$0xf]
  %s346 = scalar_lea.vmem %s3, 32
  %347 = vst [vmem:[%s346] sm:$0xf] %v344
  %348 = vst [vmem:[%s346 + $0x8] sm:$0xf] %v345
  %v351 = vrot.slane %v328, 4
  %v352 = vrot.slane %v329, 4
  %355 = vst [vmem:[%s346] sm:$0xf0] %v351
  %356 = vst [vmem:[%s346 + $0x8] sm:$0xf0] %v352
  %357 = vst [vmem:[%s346 + $0x10] sm:$0xf] %v351
  %358 = vst [vmem:[%s346 + $0x18] sm:$0xf] %v352
  // Predicated region
  $region14: #{one_conv_forward.1} parent=0 // pred_check
    _
  $region15: #{one_conv_forward.1} parent=0 // pred_check_branch
    %360 = sbr.rel (0) target = $region17
  $region16: #{one_conv_forward.1} parent=0 // pred_region
    _
  $region17: #{one_conv_forward.1} parent=0 // pred_fallthru
    _
  // Predicated region
  $region18: #{one_conv_forward.1} parent=0 // pred_check
    _
  $region19: #{one_conv_forward.1} parent=0 // pred_check_branch
    %362 = sbr.rel (0) target = $region21
  $region20: #{one_conv_forward.1} parent=0 // pred_region
    _
  $region21: #{one_conv_forward.1} parent=0 // pred_fallthru
    _

</llo_original>
